<compile_context>
chip_gen: v6e
topology: v6e:2x2x1
jax: 0.10.0
libtpu: 0.0.40
codegen_flags: <defaults>
</compile_context>

<pallas_src>
import functools
import math

import jax
import jax.numpy as jnp
from jax.experimental import pallas as pl
from jax.experimental.pallas import tpu as pltpu

LOG_STD_MIN = -20.0
LOG_STD_MAX = 2.0


def _round_up(x, m):
    return ((x + m - 1) // m) * m


def _pick_batch_block(b, cap):
    """Batch-block size: as large as `cap`, but keep >= 2 grid steps when
    B >= 2 so dimension_semantics=("parallel",) can shard across v7x's 2 TCs."""
    if b <= 1:
        return 1
    return max(1, min(cap, b // 2))


def _estimate_vmem_bytes(bblk, nq, nk, d, ap):
    """Rough double-buffered per-pipeline VMEM footprint of the in/out tiles."""
    bf2, f4 = 2, 4
    per_step_in = (bblk * nq * d * bf2        # joint_q  (bf16)
                   + bblk * nk * d * bf2      # vertex_k (bf16)
                   + bblk * nk * d * bf2      # vertex_v (bf16)
                   + bblk * 1 * nk * f4       # vertex_mask (f32)
                   + d * ap * f4              # wo_pad (resident)
                   + ap * f4)                 # bo_pad (resident)
    per_step_out = bblk * nq * ap * bf2       # mean slab (bf16)
    return 2 * (per_step_in + per_step_out)


def _attn_actor_kernel(q_ref, k_ref, v_ref, mask_ref, wo_ref, bo_ref, mean_ref):
    bblk, nq, d = q_ref.shape
    ap = wo_ref.shape[-1]
    scale = 1.0 / math.sqrt(d)

    # Scale Q (Nq*D elements) instead of the (Nq*Nk) scores; weak scalar keeps bf16.
    q = q_ref[...] * scale                          # (Bblk, Nq, D)  bf16
    k = k_ref[...]                                  # (Bblk, Nk, D)  bf16

    # Scaled dot-product attention scores on the MXU with f32 accumulation.
    scores = jnp.einsum("bqd,bkd->bqk", q, k,
                        preferred_element_type=jnp.float32)    # (Bblk, Nq, Nk)

    # Additive mask bias computed in-kernel on the VPU: 1.0 -> 0, 0.0 -> -1e9.
    bias = (mask_ref[...] - 1.0) * 1e9              # (Bblk, 1, Nk)  f32
    scores = scores + bias                          # broadcast over Nq

    # Numerically-stable softmax over keys; normalization deferred to the
    # narrow (Bblk, Nq, D) context so the EUP reciprocal touches fewer elems.
    # NOTE: fully-masked rows give a uniform softmax (matches the reference).
    m = jnp.max(scores, axis=-1, keepdims=True)
    p = jnp.exp(scores - m)
    denom = jnp.sum(p, axis=-1, keepdims=True)      # (Bblk, Nq, 1)

    ctx = jnp.einsum("bqk,bkd->bqd", p.astype(v_ref.dtype), v_ref[...],
                     preferred_element_type=jnp.float32)       # (Bblk, Nq, D)
    ctx = ctx * pl.reciprocal(denom, approx=True)

    # Shared output projection: flatten (batch, query) rows so a single matmul
    # fills the MXU M-dimension instead of per-batch Nq-row pushes.
    ctx2 = ctx.reshape(bblk * nq, d)
    mean = jnp.dot(ctx2, wo_ref[...],
                   preferred_element_type=jnp.float32) + bo_ref[...]
    mean_ref[...] = mean.reshape(bblk, nq, ap).astype(mean_ref.dtype)


@functools.partial(jax.jit, static_argnames=("batch_block",))
def attention_actor_forward(joint_q, vertex_k, vertex_v, vertex_mask,
                            wo, bo, log_std, *, batch_block=64):
    B, Nq, D = joint_q.shape
    Nk = vertex_k.shape[1]
    A = wo.shape[1]

    if vertex_mask is None:
        vertex_mask = jnp.ones((B, 1, Nk), jnp.float32)

    Bblk = _pick_batch_block(B, batch_block)
    B_pad = _round_up(B, Bblk)          # pad instead of shrinking Bblk for odd B
    Ap = _round_up(A, 128)              # lane-dense output slab (unmasked vst)

    # bf16 operands: half the HBM->VMEM bytes, native MXU rate; f32 accumulation
    # and f32 softmax math stay inside the kernel.
    q = joint_q.astype(jnp.bfloat16)
    k = vertex_k.astype(jnp.bfloat16)
    v = vertex_v.astype(jnp.bfloat16)
    mask = vertex_mask.astype(jnp.float32).reshape(B, 1, Nk)

    if B_pad != B:
        padb = ((0, B_pad - B), (0, 0), (0, 0))
        q = jnp.pad(q, padb)
        k = jnp.pad(k, padb)
        v = jnp.pad(v, padb)
        mask = jnp.pad(mask, padb)      # pad rows fully masked; sliced off below

    # Zero-pad the projection to 128 lanes (free on the 128-wide MXU);
    # wo/bo stay grid-resident (index_map returns the same block every step).
    wo_pad = jnp.zeros((D, Ap), jnp.float32).at[:, :A].set(wo.astype(jnp.float32))
    bo_pad = jnp.zeros((1, Ap), jnp.float32).at[0, :A].set(bo.astype(jnp.float32))

    grid = (B_pad // Bblk,)
    vmem_limit = int(min(64 * 1024 * 1024,
                         max(4 * 1024 * 1024,
                             8 * _estimate_vmem_bytes(Bblk, Nq, Nk, D, Ap))))

    grid_spec = pltpu.PrefetchScalarGridSpec(
        num_scalar_prefetch=0,
        grid=grid,
        in_specs=[
            pl.BlockSpec((Bblk, Nq, D), lambda b: (b, 0, 0)),    # joint_q  (bf16)
            pl.BlockSpec((Bblk, Nk, D), lambda b: (b, 0, 0)),    # vertex_k (bf16)
            pl.BlockSpec((Bblk, Nk, D), lambda b: (b, 0, 0)),    # vertex_v (bf16)
            pl.BlockSpec((Bblk, 1, Nk), lambda b: (b, 0, 0)),    # vertex_mask (f32)
            pl.BlockSpec((D, Ap), lambda b: (0, 0)),             # wo_pad (resident)
            pl.BlockSpec((1, Ap), lambda b: (0, 0)),             # bo_pad (resident)
        ],
        out_specs=pl.BlockSpec((Bblk, Nq, Ap), lambda b: (b, 0, 0)),
    )

    # TODO(synk): for non-toy Nk, add a trailing "arbitrary" grid axis over Nk
    # blocks with a flash-style online-softmax accumulator (m/l/acc VMEM scratch
    # + pl.when init/finalize), picking the Nk tile from
    # pltpu.get_tpu_info().vmem_capacity_bytes (64 MiB on v7x vs 128 MiB v5e/v6e).
    mean_pad = pl.pallas_call(
        _attn_actor_kernel,
        out_shape=jax.ShapeDtypeStruct((B_pad, Nq, Ap), jnp.bfloat16),
        grid_spec=grid_spec,
        compiler_params=pltpu.CompilerParams(
            dimension_semantics=("parallel",),
            vmem_limit_bytes=vmem_limit),
    )(q, k, v, mask, wo_pad, bo_pad)

    # Slice the batch / lane pad off; return f32 (the bf16 slab halves the
    # padded writeback while keeping the stores unmasked at 128 lanes).
    mean = mean_pad[:B, :, :A].astype(jnp.float32)

    # log_std is data-independent: clamp + broadcast in plain XLA (fuses away)
    # instead of paying a second (B, Nq, A) output DMA inside the kernel.
    log_std_out = jnp.broadcast_to(
        jnp.clip(log_std.astype(jnp.float32), LOG_STD_MIN, LOG_STD_MAX),
        mean.shape)
    return mean, log_std_out


def reference_forward(joint_q, vertex_k, vertex_v, vertex_mask, wo, bo, log_std):
    d = joint_q.shape[-1]
    scores = jnp.einsum("bqd,bkd->bqk", joint_q, vertex_k) / jnp.sqrt(jnp.float32(d))
    scores = jnp.where(vertex_mask > 0.5, scores, -1e9)
    attn = jax.nn.softmax(scores, axis=-1)
    ctx = jnp.einsum("bqk,bkd->bqd", attn, vertex_v)
    mean = ctx @ wo + bo
    ls = jnp.clip(log_std, LOG_STD_MIN, LOG_STD_MAX)
    log_std_out = jnp.broadcast_to(ls, mean.shape)
    return mean, log_std_out


if __name__ == "__main__":
    # Small shapes consistent with the module's forward.
    B, Nq, Nk, D, A = 2, 8, 8, 32, 4

    key = jax.random.PRNGKey(0)
    kq, kk, kv, kw = jax.random.split(key, 4)

    joint_q = jax.random.normal(kq, (B, Nq, D), dtype=jnp.float32)
    vertex_k = jax.random.normal(kk, (B, Nk, D), dtype=jnp.float32)
    vertex_v = jax.random.normal(kv, (B, Nk, D), dtype=jnp.float32)

    # Mask out the last 2 vertices of batch element 1 (1.0 = valid).
    vertex_mask = jnp.ones((B, 1, Nk), dtype=jnp.float32)
    vertex_mask = vertex_mask.at[1, 0, Nk - 2:].set(0.0)

    # Deterministic parameter init (synthetic, not a checkpoint load).
    wo = jax.random.normal(kw, (D, A), dtype=jnp.float32) * 0.1
    bo = jnp.zeros((A,), dtype=jnp.float32)
    log_std = jnp.zeros((A,), dtype=jnp.float32)   # nn.Parameter(torch.zeros(action_dim))

    mean, log_std_out = attention_actor_forward(
        joint_q, vertex_k, vertex_v, vertex_mask, wo, bo, log_std)
    jax.block_until_ready((mean, log_std_out))

    # Reference on the same bf16-rounded activations (the kernel feeds the MXU
    # in bf16), so the check isolates kernel-vs-XLA differences: approx (EUP)
    # reciprocal, bf16 softmax-weight cast, bf16 output slab, matmul order.
    q_r = joint_q.astype(jnp.bfloat16).astype(jnp.float32)
    k_r = vertex_k.astype(jnp.bfloat16).astype(jnp.float32)
    v_r = vertex_v.astype(jnp.bfloat16).astype(jnp.float32)
    ref_mean, ref_ls = reference_forward(q_r, k_r, v_r, vertex_mask, wo, bo, log_std)

    assert mean.shape == (B, Nq, A) and log_std_out.shape == (B, Nq, A)
    assert jnp.allclose(mean, ref_mean, atol=2e-2, rtol=2e-2)
    assert jnp.allclose(log_std_out, ref_ls, atol=1e-6)

    # TODO(synk): the `sample()` method (Normal rsample + tanh squash + log_prob)
    # is stochastic policy glue, kept outside the kernel.
    print("KERNEL_OK")
</pallas_src>

<mosaic_0001>
module attributes {stable_mosaic.version = 11 : i64} {
  func.func @_attn_actor_kernel(%arg0: i32, %arg1: memref<1x8x32xbf16, #tpu.memory_space<vmem>>, %arg2: memref<1x8x32xbf16, #tpu.memory_space<vmem>>, %arg3: memref<1x8x32xbf16, #tpu.memory_space<vmem>>, %arg4: memref<1x1x8xf32, #tpu.memory_space<vmem>>, %arg5: memref<32x128xf32, #tpu.memory_space<vmem>>, %arg6: memref<1x128xf32, #tpu.memory_space<vmem>>, %arg7: memref<1x8x128xbf16, #tpu.memory_space<vmem>>) attributes {dimension_semantics = [#tpu.dimension_semantics<parallel>], iteration_bounds = array<i64: 2>, scalar_prefetch = 0 : i64, scratch_operands = 0 : i64, tpu.core_type = #tpu.core_type<tc>, window_params = [{transform_indices = @transform_0, window_bounds = array<i64: 1, 8, 32>}, {transform_indices = @transform_1, window_bounds = array<i64: 1, 8, 32>}, {transform_indices = @transform_2, window_bounds = array<i64: 1, 8, 32>}, {transform_indices = @transform_3, window_bounds = array<i64: 1, 1, 8>}, {pipeline_mode = #tpu.pipeline_mode<synchronous>, transform_indices = @transform_4, window_bounds = array<i64: 32, 128>}, {pipeline_mode = #tpu.pipeline_mode<synchronous>, transform_indices = @transform_5, window_bounds = array<i64: 1, 128>}, {transform_indices = @transform_6, window_bounds = array<i64: 1, 8, 128>}]} {
    %c0 = arith.constant 0 : index
    %c0_0 = arith.constant 0 : index
    %c0_1 = arith.constant 0 : index
    %0 = vector.load %arg1[%c0, %c0_0, %c0_1] : memref<1x8x32xbf16, #tpu.memory_space<vmem>>, vector<1x8x32xbf16>
    %cst = arith.constant 1.767580e-01 : bf16
    %1 = vector.broadcast %cst : bf16 to vector<1x8x32xbf16>
    %2 = arith.mulf %0, %1 : vector<1x8x32xbf16>
    %c0_2 = arith.constant 0 : index
    %c0_3 = arith.constant 0 : index
    %c0_4 = arith.constant 0 : index
    %3 = vector.load %arg2[%c0_2, %c0_3, %c0_4] : memref<1x8x32xbf16, #tpu.memory_space<vmem>>, vector<1x8x32xbf16>
    "tpu.trace_start"() <{level = 10 : i32, message = "bqd,bkd->bqk"}> : () -> ()
    %cst_5 = arith.constant dense<0.000000e+00> : vector<1x8x8xf32>
    %4 = tpu.matmul %2, %3, %cst_5 {dimension_numbers = #tpu.dot_dimension_numbers<[2], [2], [1], [1], [0, 0, 0, 1, 1, 1], [0], [0]>} : vector<1x8x32xbf16>, vector<1x8x32xbf16>, vector<1x8x8xf32> -> vector<1x8x8xf32>
    "tpu.trace_stop"() : () -> ()
    %c0_6 = arith.constant 0 : index
    %c0_7 = arith.constant 0 : index
    %c0_8 = arith.constant 0 : index
    %5 = vector.load %arg4[%c0_6, %c0_7, %c0_8] : memref<1x1x8xf32, #tpu.memory_space<vmem>>, vector<1x1x8xf32>
    %cst_9 = arith.constant 1.000000e+00 : f32
    %6 = vector.broadcast %cst_9 : f32 to vector<1x1x8xf32>
    %7 = arith.subf %5, %6 : vector<1x1x8xf32>
    %cst_10 = arith.constant 1.000000e+09 : f32
    %8 = vector.broadcast %cst_10 : f32 to vector<1x1x8xf32>
    %9 = arith.mulf %7, %8 : vector<1x1x8xf32>
    %10 = vector.broadcast %9 : vector<1x1x8xf32> to vector<1x8x8xf32>
    %11 = arith.addf %4, %10 : vector<1x8x8xf32>
    %cst_11 = arith.constant dense<0xFF800000> : vector<1x8xf32>
    %12 = vector.multi_reduction <maximumf>, %11, %cst_11 [2] : vector<1x8x8xf32> to vector<1x8xf32>
    %13 = vector.shape_cast %12 : vector<1x8xf32> to vector<1x8x1xf32>
    %14 = vector.broadcast %13 : vector<1x8x1xf32> to vector<1x8x8xf32>
    %15 = arith.subf %11, %14 : vector<1x8x8xf32>
    %16 = math.exp %15 : vector<1x8x8xf32>
    %cst_12 = arith.constant dense<0.000000e+00> : vector<1x8xf32>
    %17 = vector.multi_reduction <add>, %16, %cst_12 [2] : vector<1x8x8xf32> to vector<1x8xf32>
    %18 = vector.shape_cast %17 : vector<1x8xf32> to vector<1x8x1xf32>
    %19 = arith.truncf %16 : vector<1x8x8xf32> to vector<1x8x8xbf16>
    %c0_13 = arith.constant 0 : index
    %c0_14 = arith.constant 0 : index
    %c0_15 = arith.constant 0 : index
    %20 = vector.load %arg3[%c0_13, %c0_14, %c0_15] : memref<1x8x32xbf16, #tpu.memory_space<vmem>>, vector<1x8x32xbf16>
    "tpu.trace_start"() <{level = 10 : i32, message = "bqk,bkd->bqd"}> : () -> ()
    %cst_16 = arith.constant dense<0.000000e+00> : vector<1x8x32xf32>
    %21 = tpu.matmul %19, %20, %cst_16 {dimension_numbers = #tpu.dot_dimension_numbers<[2], [1], [1], [2], [0, 0, 0, 1, 1, 2], [0], [0]>} : vector<1x8x8xbf16>, vector<1x8x32xbf16>, vector<1x8x32xf32> -> vector<1x8x32xf32>
    "tpu.trace_stop"() : () -> ()
    %22 = tpu.reciprocal %18 {approx = true} : vector<1x8x1xf32> -> vector<1x8x1xf32>
    %23 = vector.broadcast %22 : vector<1x8x1xf32> to vector<1x8x32xf32>
    %24 = arith.mulf %21, %23 : vector<1x8x32xf32>
    %25 = vector.shape_cast %24 : vector<1x8x32xf32> to vector<8x32xf32>
    %c0_17 = arith.constant 0 : index
    %c0_18 = arith.constant 0 : index
    %26 = vector.load %arg5[%c0_17, %c0_18] : memref<32x128xf32, #tpu.memory_space<vmem>>, vector<32x128xf32>
    %cst_19 = arith.constant dense<0.000000e+00> : vector<8x128xf32>
    %27 = tpu.matmul %25, %26, %cst_19 {dimension_numbers = #tpu.dot_dimension_numbers<[1], [0], [0], [1], [0, 0, 1, 1], [], []>} : vector<8x32xf32>, vector<32x128xf32>, vector<8x128xf32> -> vector<8x128xf32>
    %c0_20 = arith.constant 0 : index
    %c0_21 = arith.constant 0 : index
    %28 = vector.load %arg6[%c0_20, %c0_21] : memref<1x128xf32, #tpu.memory_space<vmem>>, vector<1x128xf32>
    %29 = vector.broadcast %28 : vector<1x128xf32> to vector<8x128xf32>
    %30 = arith.addf %27, %29 : vector<8x128xf32>
    %31 = vector.shape_cast %30 : vector<8x128xf32> to vector<1x8x128xf32>
    %32 = arith.truncf %31 : vector<1x8x128xf32> to vector<1x8x128xbf16>
    %c0_22 = arith.constant 0 : index
    %c0_23 = arith.constant 0 : index
    %c0_24 = arith.constant 0 : index
    %33 = vector.load %arg7[%c0_22, %c0_23, %c0_24] : memref<1x8x128xbf16, #tpu.memory_space<vmem>>, vector<1x8x128xbf16>
    tpu.vector_store %arg7[%c0_22, %c0_23, %c0_24], %32 {strides = array<i32>} : memref<1x8x128xbf16, #tpu.memory_space<vmem>>, vector<1x8x128xbf16>,
    return
  }
  func.func @transform_0(%arg0: i32) -> (i32, i32, i32) {
    %c0_i32 = arith.constant 0 : i32
    %c0_i32_0 = arith.constant 0 : i32
    %c0_i32_1 = arith.constant 0 : i32
    return %arg0, %c0_i32, %c0_i32_0 : i32, i32, i32
  }
  func.func @transform_1(%arg0: i32) -> (i32, i32, i32) {
    %c0_i32 = arith.constant 0 : i32
    %c0_i32_0 = arith.constant 0 : i32
    %c0_i32_1 = arith.constant 0 : i32
    return %arg0, %c0_i32, %c0_i32_0 : i32, i32, i32
  }
  func.func @transform_2(%arg0: i32) -> (i32, i32, i32) {
    %c0_i32 = arith.constant 0 : i32
    %c0_i32_0 = arith.constant 0 : i32
    %c0_i32_1 = arith.constant 0 : i32
    return %arg0, %c0_i32, %c0_i32_0 : i32, i32, i32
  }
  func.func @transform_3(%arg0: i32) -> (i32, i32, i32) {
    %c0_i32 = arith.constant 0 : i32
    %c0_i32_0 = arith.constant 0 : i32
    %c0_i32_1 = arith.constant 0 : i32
    return %arg0, %c0_i32, %c0_i32_0 : i32, i32, i32
  }
  func.func @transform_4(%arg0: i32) -> (i32, i32) {
    %c0_i32 = arith.constant 0 : i32
    %c0_i32_0 = arith.constant 0 : i32
    %c0_i32_1 = arith.constant 0 : i32
    return %c0_i32, %c0_i32_0 : i32, i32
  }
  func.func @transform_5(%arg0: i32) -> (i32, i32) {
    %c0_i32 = arith.constant 0 : i32
    %c0_i32_0 = arith.constant 0 : i32
    %c0_i32_1 = arith.constant 0 : i32
    return %c0_i32, %c0_i32_0 : i32, i32
  }
  func.func @transform_6(%arg0: i32) -> (i32, i32, i32) {
    %c0_i32 = arith.constant 0 : i32
    %c0_i32_0 = arith.constant 0 : i32
    %c0_i32_1 = arith.constant 0 : i32
    return %arg0, %c0_i32, %c0_i32_0 : i32, i32, i32
  }
}

</mosaic_0001>

<llo_original>
// kernel: attention_actor_forward.1
$region0: #{attention_actor_forward.1}
  #allocation0 [shape = 'u32[]', space=smem, size = 0x4, offset = 0x4, fixed_abs, tag = 'smem constant byte address 0x4 - core index']
  #allocation1 [shape = 'u32[144,128]{1,0:T(1,128)}', space=vmem, size = 0x12000, scoped, tag = 'internal scratch']
  %s0 = inlined_call_operand.vmem [shape: bf16[2,8,32], index: 0, kind: input, shape index: {}]
  %s1 = inlined_call_operand.vmem [shape: bf16[2,8,32], index: 1, kind: input, shape index: {}]
  %s2 = inlined_call_operand.vmem [shape: bf16[2,8,32], index: 2, kind: input, shape index: {}]
  %s3 = inlined_call_operand.vmem [shape: f32[2,1,8], index: 3, kind: input, shape index: {}]
  %s4 = inlined_call_operand.vmem [shape: f32[32,128], index: 4, kind: input, shape index: {}]
  %s5 = inlined_call_operand.vmem [shape: f32[1,128], index: 5, kind: input, shape index: {}]
  %s6 = inlined_call_operand.vmem [shape: bf16[2,8,128], index: 6, kind: output, shape index: {}]
  %s7 = sld [smem:[#allocation0]]
  $region57: #{attention_actor_forward.1} parent=0
    _
  %s9 = ssub.s32 1, %s7
  %s10 = scalar_select 0, %s9, %s7
  loop: start=0, step=1, limit=4
  $region2: #{attention_actor_forward.1} parent=0 // loop_pre_header
    _
  $region3: #{attention_actor_forward.1} parent=0 // loop_header
    %s12 = sphi 0, %s16
    %p13 = scmp.ge.s32.totalorder %s12, 4
    %s22 = sphi 0, %s24
    %s25 = sphi 0, %s22
    %s26 = sphi 0, %s25
    %s42 = sphi 0, %s26
    %s48 = sphi 0, %s50
    %s51 = sphi 0, %s48
    %s52 = sphi 0, %s51
    %s68 = sphi 0, %s52
    %s74 = sphi 0, %s76
    %s77 = sphi 0, %s74
    %s78 = sphi 0, %s77
    %s94 = sphi 0, %s78
    %s100 = sphi 0, %s102
    %s103 = sphi 0, %s100
    %s104 = sphi 0, %s103
    %s120 = sphi 0, %s104
    %s124 = sphi 0, %s124
    %s126 = sphi 0, %s124
    %s127 = sphi 0, %s126
    %s141 = sphi 0, %s127
    %s145 = sphi 0, %s145
    %s147 = sphi 0, %s145
    %s148 = sphi 0, %s147
    %s162 = sphi 0, %s148
    %s168 = sphi 0, %s170
    %s171 = sphi 0, %s168
    %s172 = sphi 0, %s171
    %s188 = sphi 0, %s172
  $region4: #{attention_actor_forward.1} parent=0 // loop_header_branch
    %15 = sbr.rel (%p13) target = $region8
  $region5: #{attention_actor_forward.1} parent=0 // loop_body
    %s17 = ssub.s32 %s12, 1
    %s18 = ssub.s32 %s12, 2
    %s19 = sadd.s32 %s12, 1
    %s20 = ssub.s32 %s12, %s19
    %p21 = scmp.eq.s32.totalorder %s20, 0
    %s23 = sadd.s32 %s22, 1
    %s24 = scalar_select %p21, %s22, %s23
    %p27 = pneg %p21
    %p28 = scmp.eq.s32.totalorder %s12, 1
    %p29 = por %p27, %p28
    %p30 = scmp.ne.s32.totalorder %s22, %s25
    %p31 = scmp.eq.s32.totalorder %s12, 0
    %p32 = por %p30, %p31
    %p33 = scmp.ne.s32.totalorder %s22, %s25
    %p34 = scmp.eq.s32.totalorder %s17, 1
    %p35 = por %p33, %p34
    %p36 = scmp.ne.s32.totalorder %s25, %s26
    %p37 = scmp.eq.s32.totalorder %s17, 0
    %p38 = por %p36, %p37
    %p39 = scmp.ne.s32.totalorder %s25, %s26
    %p40 = scmp.eq.s32.totalorder %s18, 1
    %p41 = por %p39, %p40
    %p43 = scmp.ne.s32.totalorder %s26, %s42
    %p44 = scmp.eq.s32.totalorder %s18, 0
    %p45 = por %p43, %p44
    %s46 = ssub.s32 %s12, %s19
    %p47 = scmp.eq.s32.totalorder %s46, 0
    %s49 = sadd.s32 %s48, 1
    %s50 = scalar_select %p47, %s48, %s49
    %p53 = pneg %p47
    %p54 = scmp.eq.s32.totalorder %s12, 1
    %p55 = por %p53, %p54
    %p56 = scmp.ne.s32.totalorder %s48, %s51
    %p57 = scmp.eq.s32.totalorder %s12, 0
    %p58 = por %p56, %p57
    %p59 = scmp.ne.s32.totalorder %s48, %s51
    %p60 = scmp.eq.s32.totalorder %s17, 1
    %p61 = por %p59, %p60
    %p62 = scmp.ne.s32.totalorder %s51, %s52
    %p63 = scmp.eq.s32.totalorder %s17, 0
    %p64 = por %p62, %p63
    %p65 = scmp.ne.s32.totalorder %s51, %s52
    %p66 = scmp.eq.s32.totalorder %s18, 1
    %p67 = por %p65, %p66
    %p69 = scmp.ne.s32.totalorder %s52, %s68
    %p70 = scmp.eq.s32.totalorder %s18, 0
    %p71 = por %p69, %p70
    %s72 = ssub.s32 %s12, %s19
    %p73 = scmp.eq.s32.totalorder %s72, 0
    %s75 = sadd.s32 %s74, 1
    %s76 = scalar_select %p73, %s74, %s75
    %p79 = pneg %p73
    %p80 = scmp.eq.s32.totalorder %s12, 1
    %p81 = por %p79, %p80
    %p82 = scmp.ne.s32.totalorder %s74, %s77
    %p83 = scmp.eq.s32.totalorder %s12, 0
    %p84 = por %p82, %p83
    %p85 = scmp.ne.s32.totalorder %s74, %s77
    %p86 = scmp.eq.s32.totalorder %s17, 1
    %p87 = por %p85, %p86
    %p88 = scmp.ne.s32.totalorder %s77, %s78
    %p89 = scmp.eq.s32.totalorder %s17, 0
    %p90 = por %p88, %p89
    %p91 = scmp.ne.s32.totalorder %s77, %s78
    %p92 = scmp.eq.s32.totalorder %s18, 1
    %p93 = por %p91, %p92
    %p95 = scmp.ne.s32.totalorder %s78, %s94
    %p96 = scmp.eq.s32.totalorder %s18, 0
    %p97 = por %p95, %p96
    %s98 = ssub.s32 %s12, %s19
    %p99 = scmp.eq.s32.totalorder %s98, 0
    %s101 = sadd.s32 %s100, 1
    %s102 = scalar_select %p99, %s100, %s101
    %p105 = pneg %p99
    %p106 = scmp.eq.s32.totalorder %s12, 1
    %p107 = por %p105, %p106
    %p108 = scmp.ne.s32.totalorder %s100, %s103
    %p109 = scmp.eq.s32.totalorder %s12, 0
    %p110 = por %p108, %p109
    %p111 = scmp.ne.s32.totalorder %s100, %s103
    %p112 = scmp.eq.s32.totalorder %s17, 1
    %p113 = por %p111, %p112
    %p114 = scmp.ne.s32.totalorder %s103, %s104
    %p115 = scmp.eq.s32.totalorder %s17, 0
    %p116 = por %p114, %p115
    %p117 = scmp.ne.s32.totalorder %s103, %s104
    %p118 = scmp.eq.s32.totalorder %s18, 1
    %p119 = por %p117, %p118
    %p121 = scmp.ne.s32.totalorder %s104, %s120
    %p122 = scmp.eq.s32.totalorder %s18, 0
    %p123 = por %p121, %p122
    %s125 = sadd.s32 %s124, 1
    %p128 = scmp.eq.s32.totalorder %s12, 1
    %p129 = scmp.ne.s32.totalorder %s124, %s126
    %p130 = scmp.eq.s32.totalorder %s12, 0
    %p131 = por %p129, %p130
    %p132 = scmp.ne.s32.totalorder %s124, %s126
    %p133 = scmp.eq.s32.totalorder %s17, 1
    %p134 = por %p132, %p133
    %p135 = scmp.ne.s32.totalorder %s126, %s127
    %p136 = scmp.eq.s32.totalorder %s17, 0
    %p137 = por %p135, %p136
    %p138 = scmp.ne.s32.totalorder %s126, %s127
    %p139 = scmp.eq.s32.totalorder %s18, 1
    %p140 = por %p138, %p139
    %p142 = scmp.ne.s32.totalorder %s127, %s141
    %p143 = scmp.eq.s32.totalorder %s18, 0
    %p144 = por %p142, %p143
    %s146 = sadd.s32 %s145, 1
    %p149 = scmp.eq.s32.totalorder %s12, 1
    %p150 = scmp.ne.s32.totalorder %s145, %s147
    %p151 = scmp.eq.s32.totalorder %s12, 0
    %p152 = por %p150, %p151
    %p153 = scmp.ne.s32.totalorder %s145, %s147
    %p154 = scmp.eq.s32.totalorder %s17, 1
    %p155 = por %p153, %p154
    %p156 = scmp.ne.s32.totalorder %s147, %s148
    %p157 = scmp.eq.s32.totalorder %s17, 0
    %p158 = por %p156, %p157
    %p159 = scmp.ne.s32.totalorder %s147, %s148
    %p160 = scmp.eq.s32.totalorder %s18, 1
    %p161 = por %p159, %p160
    %p163 = scmp.ne.s32.totalorder %s148, %s162
    %p164 = scmp.eq.s32.totalorder %s18, 0
    %p165 = por %p163, %p164
    %s166 = ssub.s32 %s12, %s19
    %p167 = scmp.eq.s32.totalorder %s166, 0
    %s169 = sadd.s32 %s168, 1
    %s170 = scalar_select %p167, %s168, %s169
    %p173 = pneg %p167
    %p174 = scmp.eq.s32.totalorder %s12, 1
    %p175 = por %p173, %p174
    %p176 = scmp.ne.s32.totalorder %s168, %s171
    %p177 = scmp.eq.s32.totalorder %s12, 0
    %p178 = por %p176, %p177
    %p179 = scmp.ne.s32.totalorder %s168, %s171
    %p180 = scmp.eq.s32.totalorder %s17, 1
    %p181 = por %p179, %p180
    %p182 = scmp.ne.s32.totalorder %s171, %s172
    %p183 = scmp.eq.s32.totalorder %s17, 0
    %p184 = por %p182, %p183
    %p185 = scmp.ne.s32.totalorder %s171, %s172
    %p186 = scmp.eq.s32.totalorder %s18, 1
    %p187 = por %p185, %p186
    %p189 = scmp.ne.s32.totalorder %s172, %s188
    %p190 = scmp.eq.s32.totalorder %s18, 0
    %p191 = por %p189, %p190
    %p192 = scmp.le.s32.totalorder 1, %s12
    %p193 = scmp.lt.s32.totalorder %s12, 3
    %p194 = pnand %p192, %p193
    %p195 = pneg %p194
    // Predicated region
    $region9: #{attention_actor_forward.1} parent=5 // pred_check
      _
    $region10: #{attention_actor_forward.1} parent=5 // pred_check_branch
      %197 = sbr.rel (%p194) target = $region12
    $region11: #{attention_actor_forward.1} parent=5 // pred_region
      %s198 = ssub.s32 %s12, 1
      // Predicated region
      $region13: #{attention_actor_forward.1} parent=11 // pred_check
        %p199 = pneg %p137
      $region14: #{attention_actor_forward.1} parent=11 // pred_check_branch
        %201 = sbr.rel (%p199) target = $region16
      $region15: #{attention_actor_forward.1} parent=11 // pred_region
        _
      $region16: #{attention_actor_forward.1} parent=11 // pred_fallthru
        _
      // Predicated region
      $region17: #{attention_actor_forward.1} parent=11 // pred_check
        %p202 = pneg %p158
      $region18: #{attention_actor_forward.1} parent=11 // pred_check_branch
        %204 = sbr.rel (%p202) target = $region20
      $region19: #{attention_actor_forward.1} parent=11 // pred_region
        _
      $region20: #{attention_actor_forward.1} parent=11 // pred_fallthru
        _
    $region12: #{attention_actor_forward.1} parent=5 // pred_fallthru
      _
    %p205 = scmp.lt.s32.totalorder %s12, 2
    // Predicated region
    $region21: #{attention_actor_forward.1} parent=5 // pred_check
      %p206 = pneg %p205
    $region22: #{attention_actor_forward.1} parent=5 // pred_check_branch
      %208 = sbr.rel (%p206) target = $region24
    $region23: #{attention_actor_forward.1} parent=5 // pred_region
      // Predicated region
      $region25: #{attention_actor_forward.1} parent=23 // pred_check
        %p209 = pneg %p32
      $region26: #{attention_actor_forward.1} parent=23 // pred_check_branch
        %211 = sbr.rel (%p209) target = $region28
      $region27: #{attention_actor_forward.1} parent=23 // pred_region
        %p212 = scmp.lt.s32.totalorder %s12, 1
        %s213 = scalar_select %p212, %s12, 1
        %s214 = smul.addr %s213, 4
        %s215 = scalar_lea.vmem %s0, %s214
      $region28: #{attention_actor_forward.1} parent=23 // pred_fallthru
        _
      // Predicated region
      $region29: #{attention_actor_forward.1} parent=23 // pred_check
        %p216 = pneg %p58
      $region30: #{attention_actor_forward.1} parent=23 // pred_check_branch
        %218 = sbr.rel (%p216) target = $region32
      $region31: #{attention_actor_forward.1} parent=23 // pred_region
        %p219 = scmp.lt.s32.totalorder %s12, 1
        %s220 = scalar_select %p219, %s12, 1
        %s221 = smul.addr %s220, 4
        %s222 = scalar_lea.vmem %s1, %s221
      $region32: #{attention_actor_forward.1} parent=23 // pred_fallthru
        _
      // Predicated region
      $region33: #{attention_actor_forward.1} parent=23 // pred_check
        %p223 = pneg %p84
      $region34: #{attention_actor_forward.1} parent=23 // pred_check_branch
        %225 = sbr.rel (%p223) target = $region36
      $region35: #{attention_actor_forward.1} parent=23 // pred_region
        %p226 = scmp.lt.s32.totalorder %s12, 1
        %s227 = scalar_select %p226, %s12, 1
        %s228 = smul.addr %s227, 4
        %s229 = scalar_lea.vmem %s2, %s228
      $region36: #{attention_actor_forward.1} parent=23 // pred_fallthru
        _
      // Predicated region
      $region37: #{attention_actor_forward.1} parent=23 // pred_check
        %p230 = pneg %p110
      $region38: #{attention_actor_forward.1} parent=23 // pred_check_branch
        %232 = sbr.rel (%p230) target = $region40
      $region39: #{attention_actor_forward.1} parent=23 // pred_region
        %p233 = scmp.lt.s32.totalorder %s12, 1
        %s234 = scalar_select %p233, %s12, 1
        %s235 = scalar_lea.vmem %s3, %s234
      $region40: #{attention_actor_forward.1} parent=23 // pred_fallthru
        _
    $region24: #{attention_actor_forward.1} parent=5 // pred_fallthru
      _
    %p236 = scmp.le.s32.totalorder 1, %s12
    %p237 = scmp.lt.s32.totalorder %s12, 3
    %p238 = pnand %p236, %p237
    %p239 = pneg %p238
    // Predicated region
    $region41: #{attention_actor_forward.1} parent=5 // pred_check
      _
    $region42: #{attention_actor_forward.1} parent=5 // pred_check_branch
      %241 = sbr.rel (%p238) target = $region44
    $region43: #{attention_actor_forward.1} parent=5 // pred_region
      %s242 = ssub.s32 %s12, 1
      %p243 = scmp.lt.s32.totalorder %s17, 1
      %s244 = scalar_select %p243, %s17, 1
      %s245 = smul.addr %s244, 4
      %s246 = scalar_lea.vmem %s0, %s245
      %p247 = pneg %p38
      %p248 = pneg %p35
      %p249 = scmp.lt.s32.totalorder %s17, 1
      %s250 = scalar_select %p249, %s17, 1
      %s251 = smul.addr %s250, 4
      %s252 = scalar_lea.vmem %s1, %s251
      %p253 = pneg %p64
      %p254 = pneg %p61
      %p255 = scmp.lt.s32.totalorder %s17, 1
      %s256 = scalar_select %p255, %s17, 1
      %s257 = smul.addr %s256, 4
      %s258 = scalar_lea.vmem %s2, %s257
      %p259 = pneg %p90
      %p260 = pneg %p87
      %p261 = scmp.lt.s32.totalorder %s17, 1
      %s262 = scalar_select %p261, %s17, 1
      %s263 = scalar_lea.vmem %s3, %s262
      %p264 = pneg %p116
      %p265 = pneg %p113
      %p266 = pneg %p137
      %p267 = pneg %p134
      %p268 = pneg %p158
      %p269 = pneg %p155
      %p270 = pneg %p184
      %p271 = pneg %p181
      %p272 = scmp.lt.s32.totalorder %s17, 1
      %s273 = scalar_select %p272, %s17, 1
      %s274 = smul.addr %s273, 4
      %s275 = scalar_lea.vmem %s6, %s274
      %p276 = scmp.lt.s32.totalorder %s17, 1
      %s277 = scalar_select %p276, %s17, 1
      %s278 = smul.addr %s277, 4
      %s279 = scalar_lea.vmem %s0, %s278
      %p280 = scmp.lt.s32.totalorder %s17, 1
      %s281 = scalar_select %p280, %s17, 1
      %s282 = smul.addr %s281, 4
      %s283 = scalar_lea.vmem %s1, %s282
      %p284 = scmp.lt.s32.totalorder %s17, 1
      %s285 = scalar_select %p284, %s17, 1
      %s286 = smul.addr %s285, 4
      %s287 = scalar_lea.vmem %s2, %s286
      %p288 = scmp.lt.s32.totalorder %s17, 1
      %s289 = scalar_select %p288, %s17, 1
      %s290 = scalar_lea.vmem %s3, %s289
      %p291 = scmp.lt.s32.totalorder %s17, 1
      %s292 = scalar_select %p291, %s17, 1
      %s293 = smul.addr %s292, 4
      %s294 = scalar_lea.vmem %s6, %s293
      %v297 = vld [vmem:[%s279] sm:$0xf]
      %v298 = vmul.bf16 %v297, 1043676725
      %v299 = vld [vmem:[%s283] sm:$0xf]
      %v300 = vld [vmem:[%s290] sm:$0x1]
      %v301 = vsub.f32 %v300, 1.0
      %v302 = vmul.f32 %v301, 1e+09
      %v304 = vlaneseq
      %v305 = vshrl.u32 %v304, 7
      %v306 = vsub.s32 0, %v305
      %v307 = vrot.slane %v302, %v306
      %vm309 = vcmask 261120
      %v311 = vsel %vm309, %v298, 0
      %v314 = vsel %vm309, %v299, 0
      %316 = vmatprep.subr.bf16.mxu0 0
      %317 = vmatpush1.bf16.xpose.msra.mxu0 0
      %318 = vmatprep.subr.bf16.mxu0 0
      %319 = vmatpush1.bf16.xpose.msra.mxu0 0
      %320 = vmatprep.subr.bf16.mxu0 0
      %321 = vmatpush1.bf16.xpose.msra.mxu0 0
      %322 = vmatprep.subr.bf16.mxu0 0
      %323 = vmatpush1.bf16.xpose.msra.mxu0 0
      %324 = vmatprep.subr.bf16.mxu0 0
      %325 = vmatpush1.bf16.xpose.msra.mxu0 0
      %326 = vmatprep.subr.bf16.mxu0 0
      %327 = vmatpush1.bf16.xpose.msra.mxu0 0
      %328 = vmatprep.subr.bf16.mxu0 0
      %329 = vmatpush1.bf16.xpose.msra.mxu0 0
      %330 = vmatprep.subr.bf16.mxu0 0
      %331 = vmatpush1.bf16.xpose.msra.mxu0 %v314
      %332 = vmatprep.subr.bf16.mxu0 0
      %333 = vmatpush2.bf16.xpose.msra.mxu0 0
      %334 = vmatprep.subr.bf16.mxu0 0
      %335 = vmatpush2.bf16.xpose.msra.mxu0 0
      %336 = vmatprep.subr.bf16.mxu0 0
      %337 = vmatpush2.bf16.xpose.msra.mxu0 0
      %338 = vmatprep.subr.bf16.mxu0 0
      %339 = vmatpush2.bf16.xpose.msra.mxu0 0
      %340 = vmatprep.subr.bf16.mxu0 0
      %341 = vmatpush2.bf16.xpose.msra.mxu0 0
      %342 = vmatprep.subr.bf16.mxu0 0
      %343 = vmatpush2.bf16.xpose.msra.mxu0 0
      %344 = vmatprep.subr.bf16.mxu0 0
      %345 = vmatpush2.bf16.xpose.msra.mxu0 0
      %346 = vmatprep.subr.bf16.mxu0 0
      %347 = vmatpush2.bf16.xpose.msra.mxu0 0
      %348 = vmatprep.mubr.bf16.mxu0 0
      %349 = vmatmul.mubr.bf16.gmra.mxu0 %v311
      %v350 = vpop.f32.mrf.mxu0
      %v351 = vadd.f32 %v307, %v350
      %v352 = vpop.f32.mrf.mxu0
      %v353 = vpop.f32.mrf.mxu0
      %v354 = vpop.f32.mrf.mxu0
      %355 = vdwg.mxu0
      %vm356 = vcmask 64512
      %v357 = vsel %vm356, %v351, -inf
      %358 = vmax.xlane.f32.xlu0 %v357
      %v359 = vpop.xlane.xlu0 %358
      %v360 = vsub.f32 %v351, %v359
      %v361 = vmul.f32 %v360, 1.442695
      %v362 = vpow.pop %v361
      %v363 = vsel %vm356, %v362, 0.0
      %364 = vadd.xlane.f32.xlu0 %v363
      %v365 = vpop.xlane.xlu0 %364
      %v366 = vpack.c.bf16 %v362, %v362
      %v367 = vld [vmem:[%s287] sm:$0xf]
      %v369 = vsel %vm356, %v366, 0
      %vm371 = vcmask 1043456
      %v373 = vsel %vm371, %v367, 0
      %375 = vmatprep.subr.bf16.mxu0 0
      %376 = vmatpush1.bf16.msra.mxu0 0
      %377 = vmatprep.subr.bf16.mxu0 0
      %378 = vmatpush1.bf16.msra.mxu0 0
      %379 = vmatprep.subr.bf16.mxu0 0
      %380 = vmatpush1.bf16.msra.mxu0 0
      %381 = vmatprep.subr.bf16.mxu0 0
      %382 = vmatpush1.bf16.msra.mxu0 0
      %383 = vmatprep.subr.bf16.mxu0 0
      %384 = vmatpush1.bf16.msra.mxu0 0
      %385 = vmatprep.subr.bf16.mxu0 0
      %386 = vmatpush1.bf16.msra.mxu0 0
      %387 = vmatprep.subr.bf16.mxu0 0
      %388 = vmatpush1.bf16.msra.mxu0 0
      %389 = vmatprep.subr.bf16.mxu0 0
      %390 = vmatpush1.bf16.msra.mxu0 %v373
      %391 = vmatprep.subr.bf16.mxu0 0
      %392 = vmatpush2.bf16.msra.mxu0 0
      %393 = vmatprep.subr.bf16.mxu0 0
      %394 = vmatpush2.bf16.msra.mxu0 0
      %395 = vmatprep.subr.bf16.mxu0 0
      %396 = vmatpush2.bf16.msra.mxu0 0
      %397 = vmatprep.subr.bf16.mxu0 0
      %398 = vmatpush2.bf16.msra.mxu0 0
      %399 = vmatprep.subr.bf16.mxu0 0
      %400 = vmatpush2.bf16.msra.mxu0 0
      %401 = vmatprep.subr.bf16.mxu0 0
      %402 = vmatpush2.bf16.msra.mxu0 0
      %403 = vmatprep.subr.bf16.mxu0 0
      %404 = vmatpush2.bf16.msra.mxu0 0
      %405 = vmatprep.subr.bf16.mxu0 0
      %406 = vmatpush2.bf16.msra.mxu0 0
      %407 = vmatprep.mubr.bf16.mxu0 0
      %408 = vmatmul.mubr.bf16.gmra.mxu0 %v369
      %v409 = vpop.f32.mrf.mxu0
      %v410 = vadd.f32 0.0, %v409
      %v411 = vpop.f32.mrf.mxu0
      %v412 = vpop.f32.mrf.mxu0
      %v413 = vpop.f32.mrf.mxu0
      %414 = vdwg.mxu0
      %v415 = vrcp.pop %v365
      %v416 = vmul.f32 %v410, %v415
      %v417 = vld [vmem:[%s4] sm:$0xff]
      %v418 = vld [vmem:[%s4 + $0x8] sm:$0xff]
      %v419 = vld [vmem:[%s4 + $0x10] sm:$0xff]
      %v420 = vld [vmem:[%s4 + $0x18] sm:$0xff]
      %v421 = vld [vmem:[%s5] sm:$0x1]
      %v423 = vlaneseq
      %v424 = vshrl.u32 %v423, 7
      %v425 = vsub.s32 0, %v424
      %v426 = vrot.slane %v421, %v425
      %v429 = vsel %vm309, %v416, 0
      %431 = vmatprep.subr.mxu0 0.0
      %432 = vmatpush1.msra.mxu0 0.0
      %433 = vmatprep.subr.mxu0 0.0
      %434 = vmatpush1.msra.mxu0 0.0
      %435 = vmatprep.subr.mxu0 0.0
      %436 = vmatpush1.msra.mxu0 0.0
      %437 = vmatprep.subr.mxu0 0.0
      %438 = vmatpush1.msra.mxu0 0.0
      %439 = vmatprep.subr.mxu0 0.0
      %440 = vmatpush1.msra.mxu0 0.0
      %441 = vmatprep.subr.mxu0 0.0
      %442 = vmatpush1.msra.mxu0 0.0
      %443 = vmatprep.subr.mxu0 0.0
      %444 = vmatpush1.msra.mxu0 0.0
      %445 = vmatprep.subr.mxu0 0.0
      %446 = vmatpush1.msra.mxu0 0.0
      %447 = vmatprep.subr.mxu0 0.0
      %448 = vmatpush1.msra.mxu0 0.0
      %449 = vmatprep.subr.mxu0 0.0
      %450 = vmatpush1.msra.mxu0 0.0
      %451 = vmatprep.subr.mxu0 0.0
      %452 = vmatpush1.msra.mxu0 0.0
      %453 = vmatprep.subr.mxu0 0.0
      %454 = vmatpush1.msra.mxu0 0.0
      %455 = vmatprep.subr.mxu0 0.0
      %456 = vmatpush1.msra.mxu0 %v420
      %457 = vmatprep.subr.mxu0 0.0
      %458 = vmatpush1.msra.mxu0 %v419
      %459 = vmatprep.subr.mxu0 0.0
      %460 = vmatpush1.msra.mxu0 %v418
      %461 = vmatprep.subr.mxu0 0.0
      %462 = vmatpush1.msra.mxu0 %v417
      %463 = vmatprep.subr.mxu0 0.0
      %464 = vmatpush2.msra.mxu0 0.0
      %465 = vmatprep.subr.mxu0 0.0
      %466 = vmatpush2.msra.mxu0 0.0
      %467 = vmatprep.subr.mxu0 0.0
      %468 = vmatpush2.msra.mxu0 0.0
      %469 = vmatprep.subr.mxu0 0.0
      %470 = vmatpush2.msra.mxu0 0.0
      %471 = vmatprep.subr.mxu0 0.0
      %472 = vmatpush2.msra.mxu0 0.0
      %473 = vmatprep.subr.mxu0 0.0
      %474 = vmatpush2.msra.mxu0 0.0
      %475 = vmatprep.subr.mxu0 0.0
      %476 = vmatpush2.msra.mxu0 0.0
      %477 = vmatprep.subr.mxu0 0.0
      %478 = vmatpush2.msra.mxu0 0.0
      %479 = vmatprep.subr.mxu0 0.0
      %480 = vmatpush2.msra.mxu0 0.0
      %481 = vmatprep.subr.mxu0 0.0
      %482 = vmatpush2.msra.mxu0 0.0
      %483 = vmatprep.subr.mxu0 0.0
      %484 = vmatpush2.msra.mxu0 0.0
      %485 = vmatprep.subr.mxu0 0.0
      %486 = vmatpush2.msra.mxu0 0.0
      %487 = vmatprep.subr.mxu0 0.0
      %488 = vmatpush2.msra.mxu0 0.0
      %489 = vmatprep.subr.mxu0 0.0
      %490 = vmatpush2.msra.mxu0 0.0
      %491 = vmatprep.subr.mxu0 0.0
      %492 = vmatpush2.msra.mxu0 0.0
      %493 = vmatprep.subr.mxu0 0.0
      %494 = vmatpush2.msra.mxu0 0.0
      %495 = vmatprep.mubr.f32.mxu0 0.0
      %496 = vmatmul.mubr.f32.gmra.mxu0 %v429
      %v497 = vpop.f32.mrf.mxu0
      %v498 = vadd.f32 %v426, %v497
      %v499 = vpop.f32.mrf.mxu0
      %500 = vdwg.mxu0
      %v501 = vpack.c.bf16 %v498, %v498
      %502 = vst [vmem:[%s294] sm:$0xf] %v501
      %p503 = scmp.lt.s32.totalorder %s17, 1
      %s504 = scalar_select %p503, %s17, 1
      %s505 = smul.addr %s504, 4
      %s506 = scalar_lea.vmem %s6, %s505
      // Predicated region
      $region45: #{attention_actor_forward.1} parent=43 // pred_check
        %p507 = pneg %p181
      $region46: #{attention_actor_forward.1} parent=43 // pred_check_branch
        %509 = sbr.rel (%p507) target = $region48
      $region47: #{attention_actor_forward.1} parent=43 // pred_region
        _
      $region48: #{attention_actor_forward.1} parent=43 // pred_fallthru
        _
    $region44: #{attention_actor_forward.1} parent=5 // pred_fallthru
      _
    %p510 = scmp.le.s32.totalorder 2, %s12
    // Predicated region
    $region49: #{attention_actor_forward.1} parent=5 // pred_check
      %p511 = pneg %p510
    $region50: #{attention_actor_forward.1} parent=5 // pred_check_branch
      %513 = sbr.rel (%p511) target = $region52
    $region51: #{attention_actor_forward.1} parent=5 // pred_region
      %s514 = ssub.s32 %s12, 2
      // Predicated region
      $region53: #{attention_actor_forward.1} parent=51 // pred_check
        %p515 = pneg %p187
      $region54: #{attention_actor_forward.1} parent=51 // pred_check_branch
        %517 = sbr.rel (%p515) target = $region56
      $region55: #{attention_actor_forward.1} parent=51 // pred_region
        %p518 = scmp.lt.s32.totalorder %s18, 1
        %s519 = scalar_select %p518, %s18, 1
        %s520 = smul.addr %s519, 4
        %s521 = scalar_lea.vmem %s6, %s520
      $region56: #{attention_actor_forward.1} parent=51 // pred_fallthru
        _
    $region52: #{attention_actor_forward.1} parent=5 // pred_fallthru
      _
  $region6: #{attention_actor_forward.1} parent=0 // loop_footer
    %s16 = sadd.s32 1, %s12
  $region7: #{attention_actor_forward.1} parent=0 // loop_footer_branch
    %11 = sbr.rel target = $region3
  $region8: #{attention_actor_forward.1} parent=0 // loop_exit
    _

</llo_original>
